<compile_context>
chip_gen: v7x
topology: tpu7x:2x2x1
jax: 0.10.0
libtpu: 0.0.40
codegen_flags: <defaults>
</compile_context>

<pallas_src>
import jax
import jax.numpy as jnp
from jax.experimental import pallas as pl
from jax.experimental.pallas import tpu as pltpu


def _round_up(n, m):
    return ((n + m - 1) // m) * m


# ----------------------------------------------------------------------------
# Kernel: one fused matmul + one small matmul + elementwise gating,
# everything in transposed (feature-major, row-minor) orientation.
# ----------------------------------------------------------------------------
def _integration_kernel(x_ref, wf_ref, bf_ref, w2_ref, b2_ref, out_ref):
    """
    x_ref  : (D,  tm)   transposed feature tile (lane dim = tm, fully dense)
    wf_ref : (6T, D)    fused affine weights  [gpcm | coral | cw_logit | lin | h_pre]
    bf_ref : (6T, 1)    fused bias (lane-broadcast)
    w2_ref : (T,  2T)   second interaction layer (torch layout)
    b2_ref : (T,  1)
    out_ref: (4T, tm)   [coupled | gpcm | coral | cw] stacked along sublanes
    """
    T = w2_ref.shape[0]
    x = x_ref[...].astype(jnp.float32)   # bf16 I/O path: widen on the VPU

    # one fused MXU push: rows are [gpcm | coral | cw_logits | lin | h_pre(2T)]
    z = jnp.dot(wf_ref[...], x, preferred_element_type=jnp.float32) + bf_ref[...]

    gpcm_coral = z[0:2 * T, :]                    # straight-copy rows of the slab
    cw = jax.nn.sigmoid(z[2 * T:3 * T, :])        # DynamicCoupling controller
    lin = z[3 * T:4 * T, :]                       # alpha*gpcm + gamma*coral + delta
    h = jnp.maximum(z[4 * T:6 * T, :], 0.0)       # ReLU(Linear(cat[gpcm, coral]))

    nonlin = jnp.tanh(
        jnp.dot(w2_ref[...], h, preferred_element_type=jnp.float32) + b2_ref[...]
    )
    coupled = cw * lin + (1.0 - cw) * nonlin

    odt = out_ref.dtype
    # sublane-aligned slice stores (T = 8) -- no in-kernel concatenate/shuffle
    out_ref[0:T, :] = coupled.astype(odt)
    out_ref[T:3 * T, :] = gpcm_coral.astype(odt)
    out_ref[3 * T:4 * T, :] = cw.astype(odt)


# ----------------------------------------------------------------------------
# Parameter construction (mirrors __init__ / _init_weights), torch layout.
# ----------------------------------------------------------------------------
def make_params(key, input_dim, n_cats):
    T = n_cats - 1
    assert input_dim == T, "DynamicCoupling in the reference requires input_dim == n_cats-1"
    ks = jax.random.split(key, 8)

    wg = 0.1 * jax.random.normal(ks[0], (T, input_dim), jnp.float32)
    bg = jnp.linspace(-1.0, 1.0, T, dtype=jnp.float32)
    wc = 0.1 * jax.random.normal(ks[1], (T, input_dim), jnp.float32)
    bc = jnp.linspace(-0.5, 0.5, T, dtype=jnp.float32)

    wcc = 0.1 * jax.random.normal(ks[2], (T, input_dim), jnp.float32)
    bcc = 0.1 * jax.random.normal(ks[3], (T,), jnp.float32)

    alpha = jnp.ones((T,), jnp.float32)
    gamma = jnp.ones((T,), jnp.float32)
    delta = jnp.zeros((T,), jnp.float32)

    w1 = 0.1 * jax.random.normal(ks[4], (2 * T, 2 * T), jnp.float32)
    b1 = 0.1 * jax.random.normal(ks[5], (2 * T,), jnp.float32)
    w2 = 0.1 * jax.random.normal(ks[6], (T, 2 * T), jnp.float32)
    b2 = 0.1 * jax.random.normal(ks[7], (T,), jnp.float32)

    return dict(wg=wg, bg=bg, wc=wc, bc=bc, wcc=wcc, bcc=bcc,
                alpha=alpha, gamma=gamma, delta=delta,
                w1=w1, b1=b1, w2=w2, b2=b2)


def fuse_params(p):
    """Fold every x-affine quantity into one (6T, D) slab + (6T, 1) bias
    (transposed orientation: rows = output features)."""
    T = p["bg"].shape[0]
    wg, wc = p["wg"], p["wc"]            # (T, D)
    wcc = p["wcc"]                       # (T, T)  (input_dim == T)
    w1 = p["w1"]                         # (2T, 2T)
    w1a, w1b = w1[:, :T], w1[:, T:]      # (2T, T) each

    # feats = (gpcm + coral) / 2 is affine in x
    w_feats = 0.5 * (wg + wc)
    b_feats = 0.5 * (p["bg"] + p["bc"])

    # coupling logits = wcc @ feats^T + bcc
    w_cw = wcc @ w_feats
    b_cw = wcc @ b_feats + p["bcc"]

    # linear coupling = alpha*gpcm + gamma*coral + delta
    w_lin = p["alpha"][:, None] * wg + p["gamma"][:, None] * wc
    b_lin = p["alpha"] * p["bg"] + p["gamma"] * p["bc"] + p["delta"]

    # pre-ReLU hidden = w1 @ cat[gpcm, coral]^T + b1
    w_h = w1a @ wg + w1b @ wc
    b_h = w1a @ p["bg"] + w1b @ p["bc"] + p["b1"]

    w_fused = jnp.concatenate([wg, wc, w_cw, w_lin, w_h], axis=0)                # (6T, D)
    b_fused = jnp.concatenate([p["bg"], p["bc"], b_cw, b_lin, b_h])[:, None]     # (6T, 1)

    return {"w_fused": w_fused, "b_fused": b_fused,
            "w2": p["w2"], "b2": p["b2"][:, None], "T": T}


# ----------------------------------------------------------------------------
# Wrapper
# ----------------------------------------------------------------------------
def _choose_row_tile(M, tm):
    if M <= 256:
        return M  # single full-extent tile (block_shape == array dims is always legal)
    # lane-dense tiles: multiple of 128; keep >=2 grid steps so v7x's 2 TCs
    # both get work under dimension_semantics=('parallel',).
    half = _round_up(pl.cdiv(M, 2), 128)
    return max(128, min(tm, half))


def enhanced_coral_gpcm_integration(features, params, *, tm=16384, io_dtype=jnp.float32):
    """features: (B, S, D) float32.  Returns (coupled, info_dict).

    io_dtype=jnp.bfloat16 halves HBM traffic (recommended on v5e); math stays f32.
    """
    B, S, D = features.shape
    fp = fuse_params(params)
    T = fp["T"]
    M = B * S

    # Lane-dense transposed input (D, M): one cheap wrapper transpose so every
    # in-kernel vreg and the output store are 128/128 lanes full.
    x_t = jnp.transpose(features.reshape(M, D)).astype(io_dtype)

    tm_eff = _choose_row_tile(M, tm)
    grid = pl.cdiv(M, tm_eff)   # ragged tail handled by Pallas block clipping

    wf, bf, w2, b2 = fp["w_fused"], fp["b_fused"], fp["w2"], fp["b2"]

    def const_spec(a):
        return pl.BlockSpec(a.shape, lambda i: (0, 0))

    out_t = pl.pallas_call(
        _integration_kernel,
        out_shape=jax.ShapeDtypeStruct((4 * T, M), io_dtype),
        grid_spec=pltpu.PrefetchScalarGridSpec(
            num_scalar_prefetch=0,
            grid=(grid,),
            in_specs=[pl.BlockSpec((D, tm_eff), lambda i: (0, i)),
                      const_spec(wf), const_spec(bf),
                      const_spec(w2), const_spec(b2)],
            out_specs=pl.BlockSpec((4 * T, tm_eff), lambda i: (0, i)),
        ),
        compiler_params=pltpu.CompilerParams(
            dimension_semantics=("parallel",),
            # Explicit limit: safe on v5e's 16 MiB scoped default if tm is
            # raised, and well under v7x's 64 MiB physical VMEM.
            vmem_limit_bytes=32 * 1024 * 1024,
        ),
    )(x_t, wf, bf, w2, b2)

    # Slab rows: [coupled (T) | gpcm (T) | coral (T) | cw (T)].  These views are
    # only materialized if consumed (DCE'd under jit); interaction_features is a
    # contiguous slab slice, never a separate kernel output / concat.
    def untrans(rows):
        return jnp.transpose(rows).reshape(B, S, rows.shape[0])

    coupled = untrans(out_t[0:T])
    gpcm = untrans(out_t[T:2 * T])
    coral = untrans(out_t[2 * T:3 * T])
    cw = untrans(out_t[3 * T:4 * T])
    interaction = untrans(out_t[T:3 * T])   # [gpcm | coral]

    info = {
        "gpcm_betas": gpcm,
        "coral_taus": coral,
        "coupling_info": {
            "coupling_weights": cw,
            "linear_info": {
                "alpha": params["alpha"],
                "gamma": params["gamma"],
                "delta": params["delta"],
            },
            "nonlinear_info": {"interaction_features": interaction},
        },
        "analysis_info": {},  # module is in eval mode -> analyzer is skipped
    }
    return coupled, info


# ----------------------------------------------------------------------------
# Pure-JAX reference (un-fused math, mirrors the PyTorch module)
# ----------------------------------------------------------------------------
def reference_forward(features, p):
    gpcm = features @ p["wg"].T + p["bg"]
    coral = features @ p["wc"].T + p["bc"]
    feats = (gpcm + coral) / 2
    cw = jax.nn.sigmoid(feats @ p["wcc"].T + p["bcc"])
    lin = p["alpha"] * gpcm + p["gamma"] * coral + p["delta"]
    comb = jnp.concatenate([gpcm, coral], axis=-1)
    h = jax.nn.relu(comb @ p["w1"].T + p["b1"])
    nonlin = jnp.tanh(h @ p["w2"].T + p["b2"])
    return cw * lin + (1 - cw) * nonlin


if __name__ == "__main__":
    n_cats = 9
    input_dim = n_cats - 1  # = 8 (required by DynamicCoupling, see NOTE at top)

    key = jax.random.PRNGKey(0)
    k_p, k1, k2, k3 = jax.random.split(key, 4)
    params = make_params(k_p, input_dim, n_cats)

    # --- test 1: small shape, single full-extent tile ---
    B, S = 2, 8
    feats = jax.random.normal(k1, (B, S, input_dim), jnp.float32)
    coupled, info = enhanced_coral_gpcm_integration(feats, params)
    coupled = jax.block_until_ready(coupled)
    ref = reference_forward(feats, params)
    assert coupled.shape == (B, S, n_cats - 1)
    assert jnp.allclose(coupled, ref, atol=1e-5, rtol=1e-5), "coupled mismatch vs reference"
    ref_gpcm = feats @ params["wg"].T + params["bg"]
    assert jnp.allclose(info["gpcm_betas"], ref_gpcm, atol=1e-5, rtol=1e-5), "gpcm mismatch"
    assert info["coupling_info"]["nonlinear_info"]["interaction_features"].shape == (B, S, 2 * (n_cats - 1))

    # --- test 2: ragged B*S (single tile equal to the full ragged extent) ---
    B2, S2 = 3, 7
    feats2 = jax.random.normal(k2, (B2, S2, input_dim), jnp.float32)
    coupled2, _ = enhanced_coral_gpcm_integration(feats2, params)
    jax.block_until_ready(coupled2)
    assert jnp.allclose(coupled2, reference_forward(feats2, params), atol=1e-5, rtol=1e-5), \
        "ragged mismatch vs reference"

    # --- test 3: multi-step grid with a Pallas-clipped partial tail block ---
    B3, S3 = 5, 77   # M = 385 -> tm_eff = 256, grid = 2, tail block = 129 valid columns
    feats3 = jax.random.normal(k3, (B3, S3, input_dim), jnp.float32)
    coupled3, _ = enhanced_coral_gpcm_integration(feats3, params)
    jax.block_until_ready(coupled3)
    assert jnp.allclose(coupled3, reference_forward(feats3, params), atol=1e-5, rtol=1e-5), \
        "multi-tile / clipped-tail mismatch vs reference"

    # TODO(synk): on v5e, pass io_dtype=jnp.bfloat16 (halves HBM I/O); needs a looser tolerance.
    print("KERNEL_OK")
</pallas_src>

<mosaic_0001>
module attributes {stable_mosaic.version = 11 : i64} {
  func.func @_integration_kernel(%arg0: i32, %arg1: memref<8x16xf32, #tpu.memory_space<vmem>>, %arg2: memref<48x8xf32, #tpu.memory_space<vmem>>, %arg3: memref<48x1xf32, #tpu.memory_space<vmem>>, %arg4: memref<8x16xf32, #tpu.memory_space<vmem>>, %arg5: memref<8x1xf32, #tpu.memory_space<vmem>>, %arg6: memref<32x16xf32, #tpu.memory_space<vmem>>) attributes {dimension_semantics = [#tpu.dimension_semantics<parallel>], iteration_bounds = array<i64: 1>, scalar_prefetch = 0 : i64, scratch_operands = 0 : i64, tpu.core_type = #tpu.core_type<tc>, window_params = [{transform_indices = @transform_0, window_bounds = array<i64: 8, 16>}, {pipeline_mode = #tpu.pipeline_mode<synchronous>, transform_indices = @transform_1, window_bounds = array<i64: 48, 8>}, {pipeline_mode = #tpu.pipeline_mode<synchronous>, transform_indices = @transform_2, window_bounds = array<i64: 48, 1>}, {pipeline_mode = #tpu.pipeline_mode<synchronous>, transform_indices = @transform_3, window_bounds = array<i64: 8, 16>}, {pipeline_mode = #tpu.pipeline_mode<synchronous>, transform_indices = @transform_4, window_bounds = array<i64: 8, 1>}, {transform_indices = @transform_5, window_bounds = array<i64: 32, 16>}]} {
    %c0 = arith.constant 0 : index
    %c0_0 = arith.constant 0 : index
    %0 = vector.load %arg1[%c0, %c0_0] : memref<8x16xf32, #tpu.memory_space<vmem>>, vector<8x16xf32>
    %c0_1 = arith.constant 0 : index
    %c0_2 = arith.constant 0 : index
    %1 = vector.load %arg2[%c0_1, %c0_2] : memref<48x8xf32, #tpu.memory_space<vmem>>, vector<48x8xf32>
    %cst = arith.constant dense<0.000000e+00> : vector<48x16xf32>
    %2 = tpu.matmul %1, %0, %cst {dimension_numbers = #tpu.dot_dimension_numbers<[1], [0], [0], [1], [0, 0, 1, 1], [], []>} : vector<48x8xf32>, vector<8x16xf32>, vector<48x16xf32> -> vector<48x16xf32>
    %c0_3 = arith.constant 0 : index
    %c0_4 = arith.constant 0 : index
    %3 = vector.load %arg3[%c0_3, %c0_4] : memref<48x1xf32, #tpu.memory_space<vmem>>, vector<48x1xf32>
    %4 = vector.broadcast %3 : vector<48x1xf32> to vector<48x16xf32>
    %5 = arith.addf %2, %4 : vector<48x16xf32>
    %6 = vector.extract_strided_slice %5 {offsets = [0, 0], sizes = [16, 16], strides = [1, 1]} : vector<48x16xf32> to vector<16x16xf32>
    %7 = vector.extract_strided_slice %5 {offsets = [16, 0], sizes = [8, 16], strides = [1, 1]} : vector<48x16xf32> to vector<8x16xf32>
    %8 = arith.negf %7 : vector<8x16xf32>
    %9 = math.exp %8 : vector<8x16xf32>
    %cst_5 = arith.constant 1.000000e+00 : f32
    %10 = vector.broadcast %cst_5 : f32 to vector<8x16xf32>
    %11 = arith.addf %10, %9 : vector<8x16xf32>
    %12 = arith.divf %10, %11 : vector<8x16xf32>
    %13 = vector.extract_strided_slice %5 {offsets = [24, 0], sizes = [8, 16], strides = [1, 1]} : vector<48x16xf32> to vector<8x16xf32>
    %14 = vector.extract_strided_slice %5 {offsets = [32, 0], sizes = [16, 16], strides = [1, 1]} : vector<48x16xf32> to vector<16x16xf32>
    %cst_6 = arith.constant 0.000000e+00 : f32
    %15 = vector.broadcast %cst_6 : f32 to vector<16x16xf32>
    %16 = arith.maximumf %14, %15 : vector<16x16xf32>
    %c0_7 = arith.constant 0 : index
    %c0_8 = arith.constant 0 : index
    %17 = vector.load %arg4[%c0_7, %c0_8] : memref<8x16xf32, #tpu.memory_space<vmem>>, vector<8x16xf32>
    %cst_9 = arith.constant dense<0.000000e+00> : vector<8x16xf32>
    %18 = tpu.matmul %17, %16, %cst_9 {dimension_numbers = #tpu.dot_dimension_numbers<[1], [0], [0], [1], [0, 0, 1, 1], [], []>} : vector<8x16xf32>, vector<16x16xf32>, vector<8x16xf32> -> vector<8x16xf32>
    %c0_10 = arith.constant 0 : index
    %c0_11 = arith.constant 0 : index
    %19 = vector.load %arg5[%c0_10, %c0_11] : memref<8x1xf32, #tpu.memory_space<vmem>>, vector<8x1xf32>
    %20 = vector.broadcast %19 : vector<8x1xf32> to vector<8x16xf32>
    %21 = arith.addf %18, %20 : vector<8x16xf32>
    %22 = math.tanh %21 : vector<8x16xf32>
    %23 = arith.mulf %12, %13 : vector<8x16xf32>
    %cst_12 = arith.constant 1.000000e+00 : f32
    %24 = vector.broadcast %cst_12 : f32 to vector<8x16xf32>
    %25 = arith.subf %24, %12 : vector<8x16xf32>
    %26 = arith.mulf %25, %22 : vector<8x16xf32>
    %27 = arith.addf %23, %26 : vector<8x16xf32>
    %c0_13 = arith.constant 0 : index
    %c0_14 = arith.constant 0 : index
    %28 = vector.load %arg6[%c0_13, %c0_14] : memref<32x16xf32, #tpu.memory_space<vmem>>, vector<8x16xf32>
    tpu.vector_store %arg6[%c0_13, %c0_14], %27 {strides = array<i32>} : memref<32x16xf32, #tpu.memory_space<vmem>>, vector<8x16xf32>,
    %c8 = arith.constant 8 : index
    %c0_15 = arith.constant 0 : index
    %29 = vector.load %arg6[%c8, %c0_15] : memref<32x16xf32, #tpu.memory_space<vmem>>, vector<16x16xf32>
    tpu.vector_store %arg6[%c8, %c0_15], %6 {strides = array<i32>} : memref<32x16xf32, #tpu.memory_space<vmem>>, vector<16x16xf32>,
    %c24 = arith.constant 24 : index
    %c0_16 = arith.constant 0 : index
    %30 = vector.load %arg6[%c24, %c0_16] : memref<32x16xf32, #tpu.memory_space<vmem>>, vector<8x16xf32>
    tpu.vector_store %arg6[%c24, %c0_16], %12 {strides = array<i32>} : memref<32x16xf32, #tpu.memory_space<vmem>>, vector<8x16xf32>,
    return
  }
  func.func @transform_0(%arg0: i32) -> (i32, i32) {
    %c0_i32 = arith.constant 0 : i32
    %c0_i32_0 = arith.constant 0 : i32
    return %c0_i32, %arg0 : i32, i32
  }
  func.func @transform_1(%arg0: i32) -> (i32, i32) {
    %c0_i32 = arith.constant 0 : i32
    %c0_i32_0 = arith.constant 0 : i32
    %c0_i32_1 = arith.constant 0 : i32
    return %c0_i32, %c0_i32_0 : i32, i32
  }
  func.func @transform_2(%arg0: i32) -> (i32, i32) {
    %c0_i32 = arith.constant 0 : i32
    %c0_i32_0 = arith.constant 0 : i32
    %c0_i32_1 = arith.constant 0 : i32
    return %c0_i32, %c0_i32_0 : i32, i32
  }
  func.func @transform_3(%arg0: i32) -> (i32, i32) {
    %c0_i32 = arith.constant 0 : i32
    %c0_i32_0 = arith.constant 0 : i32
    %c0_i32_1 = arith.constant 0 : i32
    return %c0_i32, %c0_i32_0 : i32, i32
  }
  func.func @transform_4(%arg0: i32) -> (i32, i32) {
    %c0_i32 = arith.constant 0 : i32
    %c0_i32_0 = arith.constant 0 : i32
    %c0_i32_1 = arith.constant 0 : i32
    return %c0_i32, %c0_i32_0 : i32, i32
  }
  func.func @transform_5(%arg0: i32) -> (i32, i32) {
    %c0_i32 = arith.constant 0 : i32
    %c0_i32_0 = arith.constant 0 : i32
    return %c0_i32, %arg0 : i32, i32
  }
}

</mosaic_0001>

<llo_original>
// kernel: tpu_custom_call.1
$region0: #{tpu_custom_call.1}
  #allocation0 [shape = 'u32[]', space=smem, size = 0x4, offset = 0x4, fixed_abs, tag = 'smem constant byte address 0x4 - core index']
  #allocation1 [shape = 'u32[144,128]{1,0:T(1,128)}', space=vmem, size = 0x12000, scoped, tag = 'internal scratch']
  %s0 = inlined_call_operand.vmem [shape: f32[8,16], index: 0, kind: input, shape index: {}]
  %s1 = inlined_call_operand.vmem [shape: f32[48,8], index: 1, kind: input, shape index: {}]
  %s2 = inlined_call_operand.vmem [shape: f32[48,1], index: 2, kind: input, shape index: {}]
  %s3 = inlined_call_operand.vmem [shape: f32[8,16], index: 3, kind: input, shape index: {}]
  %s4 = inlined_call_operand.vmem [shape: f32[8,1], index: 4, kind: input, shape index: {}]
  %s5 = inlined_call_operand.vmem [shape: f32[32,16], index: 5, kind: output, shape index: {}]
  %s6 = sld [smem:[#allocation0]]
  $region30: #{tpu_custom_call.1} parent=0
    _
  %s8 = ssub.s32 1, %s6
  %s9 = scalar_select 0, %s8, %s6
  // Predicated region
  $region2: #{tpu_custom_call.1} parent=0 // pred_check
    _
  $region3: #{tpu_custom_call.1} parent=0 // pred_check_branch
    %11 = sbr.rel (0) target = $region5
  $region4: #{tpu_custom_call.1} parent=0 // pred_region
    _
  $region5: #{tpu_custom_call.1} parent=0 // pred_fallthru
    _
  // Predicated region
  $region6: #{tpu_custom_call.1} parent=0 // pred_check
    _
  $region7: #{tpu_custom_call.1} parent=0 // pred_check_branch
    %13 = sbr.rel (0) target = $region9
  $region8: #{tpu_custom_call.1} parent=0 // pred_region
    _
  $region9: #{tpu_custom_call.1} parent=0 // pred_fallthru
    _
  // Predicated region
  $region10: #{tpu_custom_call.1} parent=0 // pred_check
    _
  $region11: #{tpu_custom_call.1} parent=0 // pred_check_branch
    %15 = sbr.rel (0) target = $region13
  $region12: #{tpu_custom_call.1} parent=0 // pred_region
    _
  $region13: #{tpu_custom_call.1} parent=0 // pred_fallthru
    _
  // Predicated region
  $region14: #{tpu_custom_call.1} parent=0 // pred_check
    _
  $region15: #{tpu_custom_call.1} parent=0 // pred_check_branch
    %17 = sbr.rel (0) target = $region17
  $region16: #{tpu_custom_call.1} parent=0 // pred_region
    _
  $region17: #{tpu_custom_call.1} parent=0 // pred_fallthru
    _
  // Predicated region
  $region18: #{tpu_custom_call.1} parent=0 // pred_check
    _
  $region19: #{tpu_custom_call.1} parent=0 // pred_check_branch
    %19 = sbr.rel (0) target = $region21
  $region20: #{tpu_custom_call.1} parent=0 // pred_region
    _
  $region21: #{tpu_custom_call.1} parent=0 // pred_fallthru
    _
  %v20 = vld [vmem:[%s0] sm:$0xff]
  %v21 = vld [vmem:[%s1] sm:$0xff]
  %v22 = vld [vmem:[%s1 + $0x8] sm:$0xff]
  %v23 = vld [vmem:[%s1 + $0x10] sm:$0xff]
  %v24 = vld [vmem:[%s1 + $0x18] sm:$0xff]
  %v25 = vld [vmem:[%s1 + $0x20] sm:$0xff]
  %v26 = vld [vmem:[%s1 + $0x28] sm:$0xff]
  %v27 = vld [vmem:[%s2] sm:$0xff]
  %v28 = vld [vmem:[%s2 + $0x8] sm:$0xff]
  %v29 = vld [vmem:[%s2 + $0x10] sm:$0xff]
  %v30 = vld [vmem:[%s2 + $0x18] sm:$0xff]
  %v31 = vld [vmem:[%s2 + $0x20] sm:$0xff]
  %v32 = vld [vmem:[%s2 + $0x28] sm:$0xff]
  %34 = vset.pattern.permute.xlu0 0
  %35 = vperm.xlu0 %34, %v27
  %v36 = vpop.permute.xlu0 %35
  %39 = vset.pattern.permute.xlu0 0
  %40 = vperm.xlu0 %39, %v28
  %v41 = vpop.permute.xlu0 %40
  %44 = vset.pattern.permute.xlu0 0
  %45 = vperm.xlu0 %44, %v29
  %v46 = vpop.permute.xlu0 %45
  %49 = vset.pattern.permute.xlu0 0
  %50 = vperm.xlu0 %49, %v30
  %v51 = vpop.permute.xlu0 %50
  %54 = vset.pattern.permute.xlu0 0
  %55 = vperm.xlu0 %54, %v31
  %v56 = vpop.permute.xlu0 %55
  %59 = vset.pattern.permute.xlu0 0
  %60 = vperm.xlu0 %59, %v32
  %v61 = vpop.permute.xlu0 %60
  %vm63 = vcmask 64512
  %v65 = vsel %vm63, %v21, 0
  %v68 = vsel %vm63, %v22, 0
  %v71 = vsel %vm63, %v23, 0
  %v74 = vsel %vm63, %v24, 0
  %v77 = vsel %vm63, %v25, 0
  %v80 = vsel %vm63, %v26, 0
  %82 = vmatprep.subr.mxu0 0.0
  %83 = vmatpush1.msra.mxu0 %v20
  %84 = vmatprep.subr.mxu0 0.0
  %85 = vmatpush1.msra.mxu0 0.0
  %86 = vmatprep.subr.mxu0 0.0
  %87 = vmatpush1.msra.mxu0 0.0
  %88 = vmatprep.subr.mxu0 0.0
  %89 = vmatpush1.msra.mxu0 0.0
  %90 = vmatprep.subr.mxu0 0.0
  %91 = vmatpush1.msra.mxu0 0.0
  %92 = vmatprep.subr.mxu0 0.0
  %93 = vmatpush1.msra.mxu0 0.0
  %94 = vmatprep.subr.mxu0 0.0
  %95 = vmatpush1.msra.mxu0 0.0
  %96 = vmatprep.subr.mxu0 0.0
  %97 = vmatpush1.msra.mxu0 0.0
  %98 = vmatprep.subr.mxu0 0.0
  %99 = vmatpush1.msra.mxu0 0.0
  %100 = vmatprep.subr.mxu0 0.0
  %101 = vmatpush1.msra.mxu0 0.0
  %102 = vmatprep.subr.mxu0 0.0
  %103 = vmatpush1.msra.mxu0 0.0
  %104 = vmatprep.subr.mxu0 0.0
  %105 = vmatpush1.msra.mxu0 0.0
  %106 = vmatprep.subr.mxu0 0.0
  %107 = vmatpush1.msra.mxu0 0.0
  %108 = vmatprep.subr.mxu0 0.0
  %109 = vmatpush1.msra.mxu0 0.0
  %110 = vmatprep.subr.mxu0 0.0
  %111 = vmatpush1.msra.mxu0 0.0
  %112 = vmatprep.subr.mxu0 0.0
  %113 = vmatpush1.msra.mxu0 0.0
  %114 = vmatprep.subr.mxu0 0.0
  %115 = vmatpush1.msra.mxu0 0.0
  %116 = vmatprep.subr.mxu0 0.0
  %117 = vmatpush1.msra.mxu0 0.0
  %118 = vmatprep.subr.mxu0 0.0
  %119 = vmatpush1.msra.mxu0 0.0
  %120 = vmatprep.subr.mxu0 0.0
  %121 = vmatpush1.msra.mxu0 0.0
  %122 = vmatprep.subr.mxu0 0.0
  %123 = vmatpush1.msra.mxu0 0.0
  %124 = vmatprep.subr.mxu0 0.0
  %125 = vmatpush1.msra.mxu0 0.0
  %126 = vmatprep.subr.mxu0 0.0
  %127 = vmatpush1.msra.mxu0 0.0
  %128 = vmatprep.subr.mxu0 0.0
  %129 = vmatpush1.msra.mxu0 0.0
  %130 = vmatprep.subr.mxu0 0.0
  %131 = vmatpush1.msra.mxu0 0.0
  %132 = vmatprep.subr.mxu0 0.0
  %133 = vmatpush1.msra.mxu0 0.0
  %134 = vmatprep.subr.mxu0 0.0
  %135 = vmatpush1.msra.mxu0 0.0
  %136 = vmatprep.subr.mxu0 0.0
  %137 = vmatpush1.msra.mxu0 0.0
  %138 = vmatprep.subr.mxu0 0.0
  %139 = vmatpush1.msra.mxu0 0.0
  %140 = vmatprep.subr.mxu0 0.0
  %141 = vmatpush1.msra.mxu0 0.0
  %142 = vmatprep.subr.mxu0 0.0
  %143 = vmatpush1.msra.mxu0 0.0
  %144 = vmatprep.subr.mxu0 0.0
  %145 = vmatpush1.msra.mxu0 0.0
  %146 = vmatprep.mubr.f32.mxu0 0.0
  %147 = vmatmul.mubr.f32.gmra.mrb[0].mxu0 %v65
  %v148 = vpop.f32.mrb[0].mxu0
  %v149 = vadd.f32 %v36, %v148
  %v150 = vpop.f32.mrb[0].mxu0
  %151 = vmatprep.mubr.f32.mxu0 0.0
  %152 = vmatmul.mubr.f32.gmra.mrb[0].mxu0 %v68
  %v153 = vpop.f32.mrb[0].mxu0
  %v154 = vadd.f32 %v41, %v153
  %v155 = vpop.f32.mrb[0].mxu0
  %156 = vmatprep.mubr.f32.mxu0 0.0
  %157 = vmatmul.mubr.f32.gmra.mrb[0].mxu0 %v71
  %v158 = vpop.f32.mrb[0].mxu0
  %v159 = vadd.f32 %v46, %v158
  %v160 = vpop.f32.mrb[0].mxu0
  %161 = vmatprep.mubr.f32.mxu0 0.0
  %162 = vmatmul.mubr.f32.gmra.mrb[0].mxu0 %v74
  %v163 = vpop.f32.mrb[0].mxu0
  %v164 = vadd.f32 %v51, %v163
  %v165 = vpop.f32.mrb[0].mxu0
  %166 = vmatprep.mubr.f32.mxu0 0.0
  %167 = vmatmul.mubr.f32.gmra.mrb[0].mxu0 %v77
  %v168 = vpop.f32.mrb[0].mxu0
  %v169 = vadd.f32 %v56, %v168
  %v170 = vpop.f32.mrb[0].mxu0
  %171 = vmatprep.mubr.f32.mxu0 0.0
  %172 = vmatmul.mubr.f32.gmra.mrb[0].mxu0 %v80
  %v173 = vpop.f32.mrb[0].mxu0
  %v174 = vadd.f32 %v61, %v173
  %v175 = vpop.f32.mrb[0].mxu0
  %176 = vdwg.mxu0
  %v177 = vxor.u32 %v159, 2147483648
  %v178 = vmul.f32 %v177, 1.442695
  %v179 = vpow.pop %v178
  %v180 = vadd.f32 %v179, 1.0
  %v181 = vrcp.pop %v180
  %v182 = vmul.f32 1.0, %v181
  %v183 = vmax.f32 %v169, 0.0
  %v184 = vmax.f32 %v174, 0.0
  %v185 = vld [vmem:[%s3] sm:$0xff]
  %v186 = vld [vmem:[%s4] sm:$0xff]
  %188 = vset.pattern.permute.xlu0 0
  %189 = vperm.xlu0 %188, %v186
  %v190 = vpop.permute.xlu0 %189
  %vm192 = vcmask 130048
  %v194 = vsel %vm192, %v185, 0
  %196 = vmatprep.subr.mxu0 0.0
  %197 = vmatpush1.msra.mxu0 %v183
  %198 = vmatprep.subr.mxu0 0.0
  %199 = vmatpush1.msra.mxu0 %v184
  %200 = vmatprep.subr.mxu0 0.0
  %201 = vmatpush1.msra.mxu0 0.0
  %202 = vmatprep.subr.mxu0 0.0
  %203 = vmatpush1.msra.mxu0 0.0
  %204 = vmatprep.subr.mxu0 0.0
  %205 = vmatpush1.msra.mxu0 0.0
  %206 = vmatprep.subr.mxu0 0.0
  %207 = vmatpush1.msra.mxu0 0.0
  %208 = vmatprep.subr.mxu0 0.0
  %209 = vmatpush1.msra.mxu0 0.0
  %210 = vmatprep.subr.mxu0 0.0
  %211 = vmatpush1.msra.mxu0 0.0
  %212 = vmatprep.subr.mxu0 0.0
  %213 = vmatpush1.msra.mxu0 0.0
  %214 = vmatprep.subr.mxu0 0.0
  %215 = vmatpush1.msra.mxu0 0.0
  %216 = vmatprep.subr.mxu0 0.0
  %217 = vmatpush1.msra.mxu0 0.0
  %218 = vmatprep.subr.mxu0 0.0
  %219 = vmatpush1.msra.mxu0 0.0
  %220 = vmatprep.subr.mxu0 0.0
  %221 = vmatpush1.msra.mxu0 0.0
  %222 = vmatprep.subr.mxu0 0.0
  %223 = vmatpush1.msra.mxu0 0.0
  %224 = vmatprep.subr.mxu0 0.0
  %225 = vmatpush1.msra.mxu0 0.0
  %226 = vmatprep.subr.mxu0 0.0
  %227 = vmatpush1.msra.mxu0 0.0
  %228 = vmatprep.subr.mxu0 0.0
  %229 = vmatpush1.msra.mxu0 0.0
  %230 = vmatprep.subr.mxu0 0.0
  %231 = vmatpush1.msra.mxu0 0.0
  %232 = vmatprep.subr.mxu0 0.0
  %233 = vmatpush1.msra.mxu0 0.0
  %234 = vmatprep.subr.mxu0 0.0
  %235 = vmatpush1.msra.mxu0 0.0
  %236 = vmatprep.subr.mxu0 0.0
  %237 = vmatpush1.msra.mxu0 0.0
  %238 = vmatprep.subr.mxu0 0.0
  %239 = vmatpush1.msra.mxu0 0.0
  %240 = vmatprep.subr.mxu0 0.0
  %241 = vmatpush1.msra.mxu0 0.0
  %242 = vmatprep.subr.mxu0 0.0
  %243 = vmatpush1.msra.mxu0 0.0
  %244 = vmatprep.subr.mxu0 0.0
  %245 = vmatpush1.msra.mxu0 0.0
  %246 = vmatprep.subr.mxu0 0.0
  %247 = vmatpush1.msra.mxu0 0.0
  %248 = vmatprep.subr.mxu0 0.0
  %249 = vmatpush1.msra.mxu0 0.0
  %250 = vmatprep.subr.mxu0 0.0
  %251 = vmatpush1.msra.mxu0 0.0
  %252 = vmatprep.subr.mxu0 0.0
  %253 = vmatpush1.msra.mxu0 0.0
  %254 = vmatprep.subr.mxu0 0.0
  %255 = vmatpush1.msra.mxu0 0.0
  %256 = vmatprep.subr.mxu0 0.0
  %257 = vmatpush1.msra.mxu0 0.0
  %258 = vmatprep.subr.mxu0 0.0
  %259 = vmatpush1.msra.mxu0 0.0
  %260 = vmatprep.mubr.f32.mxu0 0.0
  %261 = vmatmul.mubr.f32.gmra.mrb[0].mxu0 %v194
  %v262 = vpop.f32.mrb[0].mxu0
  %v263 = vadd.f32 %v190, %v262
  %v264 = vpop.f32.mrb[0].mxu0
  %265 = vdwg.mxu0
  %v266 = vtanh.pop %v263
  %v267 = vmul.f32 %v182, %v164
  %v268 = vsub.f32 1.0, %v182
  %v269 = vmul.f32 %v268, %v266
  %v270 = vadd.f32 %v267, %v269
  %271 = vst.msk [vmem:[%s5] sm:$0xff] %vm192, %v270
  %272 = vst.msk [vmem:[%s5 + $0x8] sm:$0xff] %vm192, %v149
  %273 = vst.msk [vmem:[%s5 + $0x10] sm:$0xff] %vm192, %v154
  %274 = vst.msk [vmem:[%s5 + $0x18] sm:$0xff] %vm192, %v182
  // Predicated region
  $region22: #{tpu_custom_call.1} parent=0 // pred_check
    _
  $region23: #{tpu_custom_call.1} parent=0 // pred_check_branch
    %276 = sbr.rel (0) target = $region25
  $region24: #{tpu_custom_call.1} parent=0 // pred_region
    _
  $region25: #{tpu_custom_call.1} parent=0 // pred_fallthru
    _
  // Predicated region
  $region26: #{tpu_custom_call.1} parent=0 // pred_check
    _
  $region27: #{tpu_custom_call.1} parent=0 // pred_check_branch
    %278 = sbr.rel (0) target = $region29
  $region28: #{tpu_custom_call.1} parent=0 // pred_region
    _
  $region29: #{tpu_custom_call.1} parent=0 // pred_fallthru
    _

</llo_original>
